<compile_context>
chip_gen: v7x
topology: tpu7x:2x2x1
jax: 0.10.0
libtpu: 0.0.40
codegen_flags: <defaults>
</compile_context>

<pallas_src>
import jax
import jax.numpy as jnp
from jax.experimental import pallas as pl
from jax.experimental.pallas import tpu as pltpu

BN_EPS = 1e-5
LEAKY_SLOPE = 0.01


def _round_up(a, b):
    return (a + b - 1) // b * b


# ------------------------------- kernel --------------------------------------

def encoder_kernel(x_ref, w1_ref, gamma_ref, beta_ref, w2_ref, out_ref, acc_ref):
    k = pl.program_id(1)

    @pl.when(k == 0)
    def _init():
        acc_ref[...] = jnp.zeros_like(acc_ref)

    # fc1 partial product for this (H-tile, K-slab): bf16 MXU inputs, f32 acc.
    acc_ref[...] += jnp.dot(x_ref[...], w1_ref[...],
                            preferred_element_type=jnp.float32)

    @pl.when(k == pl.num_programs(1) - 1)
    def _finalize():
        # fc1 bias intentionally omitted: BN's mean subtraction cancels it.
        h1 = acc_ref[...]                                   # [B, TH], f32

        # BatchNorm1d training-mode stats (biased). Per-feature sublane sums —
        # cheaper and more accurate than an M=1 MXU dot at small B.
        b = h1.shape[0]
        inv_b = 1.0 / b
        mu = jnp.sum(h1, axis=0, keepdims=True) * inv_b                 # [1, TH]
        ex2 = jnp.sum(h1 * h1, axis=0, keepdims=True) * inv_b           # [1, TH]
        var = jnp.maximum(ex2 - mu * mu, 0.0)               # clamp cancellation
        inv_std = jax.lax.rsqrt(var + BN_EPS)

        # Fold normalize + affine into one scale/shift (FMA-shaped).
        scale = gamma_ref[...] * inv_std                    # [1, TH]
        shift = beta_ref[...] - mu * scale                  # [1, TH]
        hn = h1 * scale + shift

        # LeakyReLU(0.01)
        h = jnp.where(hn >= 0, hn, LEAKY_SLOPE * hn)

        # Fused fc2 heads, partial contribution of this H-tile (lane-dense [B,P]).
        out = jnp.dot(h.astype(jnp.bfloat16), w2_ref[...],
                      preferred_element_type=jnp.float32)
        out_ref[...] = out.astype(out_ref.dtype)


# ------------------------------ tile selection --------------------------------

def _pick_tiles(B, G, Hp, P, *, tk_max, th_target, nbuf, vmem_limit_bytes):
    # Hidden-dim tile (the "parallel" / megacore axis).
    TH = min(Hp, max(128, _round_up(th_target, 128)))
    Hp2 = _round_up(Hp, TH)

    if vmem_limit_bytes is None:
        try:
            info = pltpu.get_tpu_info()
            cap = int(getattr(info, "vmem_capacity_bytes", 64 * 1024 * 1024))
        except Exception:
            cap = 64 * 1024 * 1024            # conservative (v7x-sized) fallback
        vmem_limit_bytes = cap * 3 // 4       # v7x: ~48 MiB, v5e/v6e: ~96 MiB

    budget = vmem_limit_bytes * 4 // 5        # headroom for compiler scratch
    # Resident / per-H-tile pieces (bytes).
    fixed = (2 * TH * P * 2          # fused fc2 weights (bf16, double-buffered)
             + B * TH * 4            # f32 accumulator scratch
             + 2 * B * P * 4         # f32 output block (double-buffered)
             + 2 * 2 * TH * 4)       # gamma / beta blocks
    # Streamed bytes per K element (w1 column-chunk + x column), bf16, n-buffered.
    per_k = nbuf * (TH * 2 + B * 2)

    tk = (budget - fixed) // per_k if budget > fixed else 128
    tk = max(128, min(int(tk_max), int(tk)))
    tk = (tk // 128) * 128
    TK = min(tk, _round_up(G, 128))
    Gp = _round_up(_round_up(G, 128), TK)
    return TK, TH, Hp2, Gp, int(vmem_limit_bytes)


# ------------------------------- wrapper --------------------------------------

def encoder_forward(x, params, *, tk_max=4096, th_target=512, stream_buffers=2,
                    vmem_limit_bytes=None):
    x = jnp.asarray(x, jnp.float32)
    B, G = x.shape
    H = params["w1"].shape[1]
    L = params["w_mean"].shape[1]

    Hp = _round_up(H, 128)                     # hidden, lane-aligned
    P = _round_up(2 * L, 128)                  # fused/lane-dense output width
    TK, TH, Hp2, Gp, vmem_limit_bytes = _pick_tiles(
        B, G, Hp, P, tk_max=tk_max, th_target=th_target,
        nbuf=max(2, stream_buffers), vmem_limit_bytes=vmem_limit_bytes)
    NH = Hp2 // TH
    KT = Gp // TK

    # ---- host-side layout plumbing (zero padding, head fusion, bf16 casts) ----
    xp = jnp.zeros((B, Gp), jnp.bfloat16).at[:, :G].set(x.astype(jnp.bfloat16))

    w1 = jnp.zeros((Gp, Hp2), jnp.float32).at[:G, :H].set(params["w1"])
    w1 = w1.astype(jnp.bfloat16)               # halves the dominant HBM stream
    gamma = jnp.ones((1, Hp2), jnp.float32).at[:, :H].set(params["gamma"])
    beta = jnp.zeros((1, Hp2), jnp.float32).at[:, :H].set(params["beta"])
    # b1 is NOT shipped: BN's mean subtraction cancels any constant fc1 bias.

    # Fuse the two heads: w2 = [w_mean | w_logvar | 0-pad]; bias added in wrapper.
    w2 = jnp.zeros((Hp2, P), jnp.float32)
    w2 = w2.at[:H, :L].set(params["w_mean"]).at[:H, L:2 * L].set(params["w_logvar"])
    w2 = w2.astype(jnp.bfloat16)
    b2 = jnp.zeros((1, P), jnp.float32)
    b2 = b2.at[:, :L].set(params["b_mean"]).at[:, L:2 * L].set(params["b_logvar"])

    def stream_spec(shape, idx):
        if stream_buffers > 2:
            return pl.BlockSpec(shape, idx, pipeline_mode=pl.Buffered(stream_buffers))
        return pl.BlockSpec(shape, idx)

    cost = pl.CostEstimate(
        flops=2 * B * Gp * Hp2 + 2 * B * Hp2 * P,
        transcendentals=Hp2,
        bytes_accessed=(Gp * Hp2 * 2 + NH * B * Gp * 2 + Hp2 * P * 2
                        + NH * B * P * 4 + 2 * Hp2 * 4),
    )

    partials = pl.pallas_call(
        encoder_kernel,
        out_shape=jax.ShapeDtypeStruct((NH, B, P), jnp.float32),
        grid_spec=pltpu.PrefetchScalarGridSpec(
            num_scalar_prefetch=0,
            grid=(NH, KT),                                   # (H-tiles, K-slabs)
            in_specs=[
                stream_spec((B, TK), lambda h, k: (0, k)),   # x K-slab (bf16)
                stream_spec((TK, TH), lambda h, k: (k, h)),  # w1 slab (bf16, dominant)
                pl.BlockSpec((1, TH), lambda h, k: (0, h)),  # gamma
                pl.BlockSpec((1, TH), lambda h, k: (0, h)),  # beta
                pl.BlockSpec((TH, P), lambda h, k: (h, 0)),  # fused fc2 weights
            ],
            out_specs=pl.BlockSpec((None, B, P), lambda h, k: (h, 0, 0)),
            scratch_shapes=[pltpu.VMEM((B, TH), jnp.float32)],   # fc1 accumulator
        ),
        compiler_params=pltpu.CompilerParams(
            dimension_semantics=("parallel", "arbitrary"),
            vmem_limit_bytes=vmem_limit_bytes,
        ),
        cost_estimate=cost,
    )(xp, w1, gamma, beta, w2)

    fused = jnp.sum(partials, axis=0) + b2                   # [B, P]
    return fused[:, :L], fused[:, L:2 * L]


# ----------------------------- init + references -----------------------------

def xavier_normal(key, fan_in, fan_out):
    # nn.init.xavier_normal_ on a Linear weight [out, in]; stored here as [in, out].
    std = (2.0 / (fan_in + fan_out)) ** 0.5
    return std * jax.random.normal(key, (fan_in, fan_out), dtype=jnp.float32)


def init_params(key, gene_num, hidden_dim, latent_size):
    k1, k2, k3 = jax.random.split(key, 3)
    return {
        "w1": xavier_normal(k1, gene_num, hidden_dim),
        "b1": jnp.zeros((1, hidden_dim), jnp.float32),   # kept for API parity
        "gamma": jnp.ones((1, hidden_dim), jnp.float32),
        "beta": jnp.zeros((1, hidden_dim), jnp.float32),
        "w_mean": xavier_normal(k2, hidden_dim, latent_size),
        "b_mean": jnp.zeros((1, latent_size), jnp.float32),
        "w_logvar": xavier_normal(k3, hidden_dim, latent_size),
        "b_logvar": jnp.zeros((1, latent_size), jnp.float32),
    }


def encoder_ref_f32(x, p):
    """Pure-f32 reference matching the PyTorch module exactly."""
    h1 = x @ p["w1"] + p["b1"]
    mu = h1.mean(axis=0, keepdims=True)
    var = ((h1 - mu) ** 2).mean(axis=0, keepdims=True)
    hn = (h1 - mu) / jnp.sqrt(var + BN_EPS) * p["gamma"] + p["beta"]
    h = jnp.where(hn >= 0, hn, LEAKY_SLOPE * hn)
    return h @ p["w_mean"] + p["b_mean"], h @ p["w_logvar"] + p["b_logvar"]


def encoder_ref_bf16(x, p):
    """Reference emulating the kernel's bf16 matmul inputs / f32 accumulation."""
    def mm(a, b):
        return jnp.dot(a.astype(jnp.bfloat16), b.astype(jnp.bfloat16),
                       preferred_element_type=jnp.float32)
    h1 = mm(x, p["w1"]) + p["b1"]
    mu = h1.mean(axis=0, keepdims=True)
    var = jnp.maximum((h1 * h1).mean(axis=0, keepdims=True) - mu * mu, 0.0)
    hn = (h1 - mu) * jax.lax.rsqrt(var + BN_EPS) * p["gamma"] + p["beta"]
    h = jnp.where(hn >= 0, hn, LEAKY_SLOPE * hn)
    return mm(h, p["w_mean"]) + p["b_mean"], mm(h, p["w_logvar"]) + p["b_logvar"]


if __name__ == "__main__":
    # Small shapes chosen so the test exercises both grid axes:
    # Gp=384 -> 3 K-slabs of 128; Hp=256 -> 2 parallel H-tiles of 128.
    B, GENE_NUM, HIDDEN, LATENT = 8, 300, 192, 16

    key = jax.random.PRNGKey(0)
    kx, kp = jax.random.split(key)
    x = jax.random.normal(kx, (B, GENE_NUM), dtype=jnp.float32)
    params = init_params(kp, GENE_NUM, HIDDEN, LATENT)

    mean, logvar = encoder_forward(x, params, tk_max=128, th_target=128)
    jax.block_until_ready((mean, logvar))
    assert mean.shape == (B, LATENT) and logvar.shape == (B, LATENT)

    # Default (auto-sized) tiling path too.
    mean2, logvar2 = encoder_forward(x, params)
    jax.block_until_ready((mean2, logvar2))
    assert jnp.allclose(mean, mean2, atol=1e-3, rtol=1e-3)
    assert jnp.allclose(logvar, logvar2, atol=1e-3, rtol=1e-3)

    # Tight check vs a bf16-matmul-emulating reference (same arithmetic regime).
    m_bf, l_bf = encoder_ref_bf16(x, params)
    assert jnp.allclose(mean, m_bf, atol=2e-2, rtol=2e-2)
    assert jnp.allclose(logvar, l_bf, atol=2e-2, rtol=2e-2)

    # Looser check vs the exact f32 module semantics (bf16 matmul inputs).
    m_32, l_32 = encoder_ref_f32(x, params)
    assert jnp.allclose(mean, m_32, atol=8e-2, rtol=8e-2)
    assert jnp.allclose(logvar, l_32, atol=8e-2, rtol=8e-2)

    print("KERNEL_OK")
</pallas_src>

<mosaic_0001>
module attributes {stable_mosaic.version = 11 : i64} {
  func.func @encoder_kernel(%arg0: i32, %arg1: i32, %arg2: memref<8x128xbf16, #tpu.memory_space<vmem>>, %arg3: memref<128x128xbf16, #tpu.memory_space<vmem>>, %arg4: memref<1x128xf32, #tpu.memory_space<vmem>>, %arg5: memref<1x128xf32, #tpu.memory_space<vmem>>, %arg6: memref<128x128xbf16, #tpu.memory_space<vmem>>, %arg7: memref<1x8x128xf32, #tpu.memory_space<vmem>>, %arg8: memref<8x128xf32, #tpu.memory_space<vmem>>) attributes {dimension_semantics = [#tpu.dimension_semantics<parallel>, #tpu.dimension_semantics<arbitrary>], iteration_bounds = array<i64: 2, 3>, scalar_prefetch = 0 : i64, scratch_operands = 1 : i64, tpu.core_type = #tpu.core_type<tc>, window_params = [{transform_indices = @transform_0, window_bounds = array<i64: 8, 128>}, {transform_indices = @transform_1, window_bounds = array<i64: 128, 128>}, {transform_indices = @transform_2, window_bounds = array<i64: 1, 128>}, {transform_indices = @transform_3, window_bounds = array<i64: 1, 128>}, {transform_indices = @transform_4, window_bounds = array<i64: 128, 128>}, {transform_indices = @transform_5, window_bounds = array<i64: 1, 8, 128>}]} {
    %c0_i32 = arith.constant 0 : i32
    %0 = arith.cmpi eq, %arg1, %c0_i32 : i32
    %1 = arith.extui %0 : i1 to i32
    %c0_i32_0 = arith.constant 0 : i32
    %2 = arith.cmpi ne, %1, %c0_i32_0 : i32
    scf.if %2 {
      %cst_9 = arith.constant 0.000000e+00 : f32
      %12 = vector.broadcast %cst_9 : f32 to vector<8x128xf32>
      %c0_10 = arith.constant 0 : index
      %c0_11 = arith.constant 0 : index
      %13 = vector.load %arg8[%c0_10, %c0_11] : memref<8x128xf32, #tpu.memory_space<vmem>>, vector<8x128xf32>
      tpu.vector_store %arg8[%c0_10, %c0_11], %12 {strides = array<i32>} : memref<8x128xf32, #tpu.memory_space<vmem>>, vector<8x128xf32>,
    } else {
    }
    %c0 = arith.constant 0 : index
    %c0_1 = arith.constant 0 : index
    %3 = vector.load %arg8[%c0, %c0_1] : memref<8x128xf32, #tpu.memory_space<vmem>>, vector<8x128xf32>
    %c0_2 = arith.constant 0 : index
    %c0_3 = arith.constant 0 : index
    %4 = vector.load %arg2[%c0_2, %c0_3] : memref<8x128xbf16, #tpu.memory_space<vmem>>, vector<8x128xbf16>
    %c0_4 = arith.constant 0 : index
    %c0_5 = arith.constant 0 : index
    %5 = vector.load %arg3[%c0_4, %c0_5] : memref<128x128xbf16, #tpu.memory_space<vmem>>, vector<128x128xbf16>
    %cst = arith.constant dense<0.000000e+00> : vector<8x128xf32>
    %6 = tpu.matmul %4, %5, %cst {dimension_numbers = #tpu.dot_dimension_numbers<[1], [0], [0], [1], [0, 0, 1, 1], [], []>} : vector<8x128xbf16>, vector<128x128xbf16>, vector<8x128xf32> -> vector<8x128xf32>
    %7 = arith.addf %3, %6 : vector<8x128xf32>
    %c0_6 = arith.constant 0 : index
    %c0_7 = arith.constant 0 : index
    %8 = vector.load %arg8[%c0_6, %c0_7] : memref<8x128xf32, #tpu.memory_space<vmem>>, vector<8x128xf32>
    tpu.vector_store %arg8[%c0_6, %c0_7], %7 {strides = array<i32>} : memref<8x128xf32, #tpu.memory_space<vmem>>, vector<8x128xf32>,
    %c2_i32 = arith.constant 2 : i32
    %9 = arith.cmpi eq, %arg1, %c2_i32 : i32
    %10 = arith.extui %9 : i1 to i32
    %c0_i32_8 = arith.constant 0 : i32
    %11 = arith.cmpi ne, %10, %c0_i32_8 : i32
    scf.if %11 {
      %c0_9 = arith.constant 0 : index
      %c0_10 = arith.constant 0 : index
      %12 = vector.load %arg8[%c0_9, %c0_10] : memref<8x128xf32, #tpu.memory_space<vmem>>, vector<8x128xf32>
      %cst_11 = arith.constant dense<0.000000e+00> : vector<128xf32>
      %13 = vector.multi_reduction <add>, %12, %cst_11 [0] : vector<8x128xf32> to vector<128xf32>
      %14 = vector.shape_cast %13 : vector<128xf32> to vector<1x128xf32>
      %cst_12 = arith.constant 1.250000e-01 : f32
      %15 = vector.broadcast %cst_12 : f32 to vector<1x128xf32>
      %16 = arith.mulf %14, %15 : vector<1x128xf32>
      %17 = arith.mulf %12, %12 : vector<8x128xf32>
      %cst_13 = arith.constant dense<0.000000e+00> : vector<128xf32>
      %18 = vector.multi_reduction <add>, %17, %cst_13 [0] : vector<8x128xf32> to vector<128xf32>
      %19 = vector.shape_cast %18 : vector<128xf32> to vector<1x128xf32>
      %cst_14 = arith.constant 1.250000e-01 : f32
      %20 = vector.broadcast %cst_14 : f32 to vector<1x128xf32>
      %21 = arith.mulf %19, %20 : vector<1x128xf32>
      %22 = arith.mulf %16, %16 : vector<1x128xf32>
      %23 = arith.subf %21, %22 : vector<1x128xf32>
      %cst_15 = arith.constant 0.000000e+00 : f32
      %24 = vector.broadcast %cst_15 : f32 to vector<1x128xf32>
      %25 = arith.maximumf %23, %24 : vector<1x128xf32>
      %cst_16 = arith.constant 9.99999974E-6 : f32
      %26 = vector.broadcast %cst_16 : f32 to vector<1x128xf32>
      %27 = arith.addf %25, %26 : vector<1x128xf32>
      %28 = math.rsqrt %27 : vector<1x128xf32>
      %c0_17 = arith.constant 0 : index
      %c0_18 = arith.constant 0 : index
      %29 = vector.load %arg4[%c0_17, %c0_18] : memref<1x128xf32, #tpu.memory_space<vmem>>, vector<1x128xf32>
      %30 = arith.mulf %29, %28 : vector<1x128xf32>
      %c0_19 = arith.constant 0 : index
      %c0_20 = arith.constant 0 : index
      %31 = vector.load %arg5[%c0_19, %c0_20] : memref<1x128xf32, #tpu.memory_space<vmem>>, vector<1x128xf32>
      %32 = arith.mulf %16, %30 : vector<1x128xf32>
      %33 = arith.subf %31, %32 : vector<1x128xf32>
      %34 = vector.broadcast %30 : vector<1x128xf32> to vector<8x128xf32>
      %35 = arith.mulf %12, %34 : vector<8x128xf32>
      %36 = vector.broadcast %33 : vector<1x128xf32> to vector<8x128xf32>
      %37 = arith.addf %35, %36 : vector<8x128xf32>
      %cst_21 = arith.constant 0.000000e+00 : f32
      %38 = vector.broadcast %cst_21 : f32 to vector<8x128xf32>
      %39 = arith.cmpf oge, %37, %38 : vector<8x128xf32>
      %cst_22 = arith.constant 0.00999999977 : f32
      %40 = vector.broadcast %cst_22 : f32 to vector<8x128xf32>
      %41 = arith.mulf %40, %37 : vector<8x128xf32>
      %42 = arith.select %39, %37, %41 : vector<8x128xi1>, vector<8x128xf32>
      %43 = arith.truncf %42 : vector<8x128xf32> to vector<8x128xbf16>
      %c0_23 = arith.constant 0 : index
      %c0_24 = arith.constant 0 : index
      %44 = vector.load %arg6[%c0_23, %c0_24] : memref<128x128xbf16, #tpu.memory_space<vmem>>, vector<128x128xbf16>
      %cst_25 = arith.constant dense<0.000000e+00> : vector<8x128xf32>
      %45 = tpu.matmul %43, %44, %cst_25 {dimension_numbers = #tpu.dot_dimension_numbers<[1], [0], [0], [1], [0, 0, 1, 1], [], []>} : vector<8x128xbf16>, vector<128x128xbf16>, vector<8x128xf32> -> vector<8x128xf32>
      %c0_26 = arith.constant 0 : index
      %c0_27 = arith.constant 0 : index
      %c0_28 = arith.constant 0 : index
      %46 = vector.load %arg7[%c0_26, %c0_27, %c0_28] : memref<1x8x128xf32, #tpu.memory_space<vmem>>, vector<1x8x128xf32>
      %47 = vector.shape_cast %46 : vector<1x8x128xf32> to vector<8x128xf32>
      %48 = vector.shape_cast %45 : vector<8x128xf32> to vector<1x8x128xf32>
      tpu.vector_store %arg7[%c0_26, %c0_27, %c0_28], %48 {strides = array<i32>} : memref<1x8x128xf32, #tpu.memory_space<vmem>>, vector<1x8x128xf32>,
    } else {
    }
    return
  }
  func.func @transform_0(%arg0: i32, %arg1: i32) -> (i32, i32) {
    %c0_i32 = arith.constant 0 : i32
    %c0_i32_0 = arith.constant 0 : i32
    return %c0_i32, %arg1 : i32, i32
  }
  func.func @transform_1(%arg0: i32, %arg1: i32) -> (i32, i32) {
    %c0_i32 = arith.constant 0 : i32
    return %arg1, %arg0 : i32, i32
  }
  func.func @transform_2(%arg0: i32, %arg1: i32) -> (i32, i32) {
    %c0_i32 = arith.constant 0 : i32
    %c0_i32_0 = arith.constant 0 : i32
    return %c0_i32, %arg0 : i32, i32
  }
  func.func @transform_3(%arg0: i32, %arg1: i32) -> (i32, i32) {
    %c0_i32 = arith.constant 0 : i32
    %c0_i32_0 = arith.constant 0 : i32
    return %c0_i32, %arg0 : i32, i32
  }
  func.func @transform_4(%arg0: i32, %arg1: i32) -> (i32, i32) {
    %c0_i32 = arith.constant 0 : i32
    %c0_i32_0 = arith.constant 0 : i32
    return %arg0, %c0_i32 : i32, i32
  }
  func.func @transform_5(%arg0: i32, %arg1: i32) -> (i32, i32, i32) {
    %c0_i32 = arith.constant 0 : i32
    %c0_i32_0 = arith.constant 0 : i32
    %c0_i32_1 = arith.constant 0 : i32
    return %arg0, %c0_i32, %c0_i32_0 : i32, i32, i32
  }
}

</mosaic_0001>

<llo_original>
// kernel: tpu_custom_call.1
$region0: #{tpu_custom_call.1}
  #allocation0 [shape = 'u32[]', space=smem, size = 0x4, offset = 0x4, fixed_abs, tag = 'smem constant byte address 0x4 - core index']
  #allocation1 [shape = 'u32[144,128]{1,0:T(1,128)}', space=vmem, size = 0x12000, scoped, tag = 'internal scratch']
  #allocation2 [shape = 'f32[8,128]{1,0:T(8,128)}', space=vmem, size = 0x1000, scoped, tag = 'scratch operand']
  %s0 = inlined_call_operand.hbm [shape: bf16[8,384], index: 0, kind: input, shape index: {}]
  %s1 = inlined_call_operand.hbm [shape: bf16[384,256], index: 1, kind: input, shape index: {}]
  %s2 = inlined_call_operand.vmem [shape: f32[1,256], index: 2, kind: input, shape index: {}]
  %s3 = inlined_call_operand.vmem [shape: f32[1,256], index: 3, kind: input, shape index: {}]
  %s4 = inlined_call_operand.hbm [shape: bf16[256,128], index: 4, kind: input, shape index: {}]
  %s5 = inlined_call_operand.hbm [shape: f32[2,8,128], index: 5, kind: output, shape index: {}]
  %s6 = sld [smem:[#allocation0]]
  $region73: #{tpu_custom_call.1} parent=0
    _
  %s8 = ssub.s32 1, %s6
  %s9 = scalar_select 0, %s8, %s6
  $region1: #{tpu_custom_call.1} parent=0
    #allocation3 [shape = 'u8[4096]{0}', space=vmem, size = 0x1000, scoped, tag = 'input window, operand 0']
    #allocation4 [shape = 's32[2]{0}', space=sflag, size = 0x8, scoped, tag = 'scoped memory for tpu_custom_call.1']
    #allocation5 [shape = 's32[2]{0}', space=sflag, size = 0x8, scoped, tag = 'scoped memory for tpu_custom_call.1']
    #allocation6 [shape = 'u8[65536]{0}', space=vmem, size = 0x10000, scoped, tag = 'input window, operand 1']
    #allocation7 [shape = 's32[2]{0}', space=sflag, size = 0x8, scoped, tag = 'scoped memory for tpu_custom_call.1']
    #allocation8 [shape = 'u8[65536]{0}', space=vmem, size = 0x10000, scoped, tag = 'input window, operand 4']
    #allocation9 [shape = 'u8[8192]{0}', space=vmem, size = 0x2000, scoped, tag = 'output window, operand 0']
    %10 = vsyncpa [#allocation4], 0
    %s11 = scalar_lea.sflag [#allocation4], 1
    %12 = vsyncpa %s11, 0
    %13 = vsyncpa [#allocation7], 0
    %s14 = scalar_lea.sflag [#allocation7], 1
    %15 = vsyncpa %s14, 0
    %16 = vsyncpa [#allocation5], 0
    %s17 = scalar_lea.sflag [#allocation5], 1
    %18 = vsyncpa %s17, 0
    loop: start=0, step=1, limit=8
    $region2: #{tpu_custom_call.1} parent=1 // loop_pre_header
      _
    $region3: #{tpu_custom_call.1} parent=1 // loop_header
      %s20 = sphi 0, %s24
      %p21 = scmp.ge.s32.totalorder %s20, 8
      %s27 = sphi 0, %s39
      %s28 = sphi 0, %s35
      %s29 = sphi 0, %s27
      %s30 = sphi 0, %s28
      %s31 = sphi 0, %s29
      %s32 = sphi 0, %s30
      %s42 = sphi 0, %s44
      %s45 = sphi 0, %s42
      %s46 = sphi 0, %s45
      %s62 = sphi 0, %s46
      %s70 = sphi 0, %s72
      %s73 = sphi 0, %s70
      %s74 = sphi 0, %s73
      %s90 = sphi 0, %s74
      %s96 = sphi 0, %s98
      %s99 = sphi 0, %s96
      %s100 = sphi 0, %s99
      %s116 = sphi 0, %s100
      %s122 = sphi 0, %s124
      %s125 = sphi 0, %s122
      %s126 = sphi 0, %s125
      %s142 = sphi 0, %s126
      %s148 = sphi 0, %s150
      %s151 = sphi 0, %s148
      %s152 = sphi 0, %s151
      %s168 = sphi 0, %s152
      %s174 = sphi 0, %s176
      %s177 = sphi 0, %s174
      %s178 = sphi 0, %s177
      %s194 = sphi 0, %s178
    $region4: #{tpu_custom_call.1} parent=1 // loop_header_branch
      %23 = sbr.rel (%p21) target = $region8
    $region5: #{tpu_custom_call.1} parent=1 // loop_body
      %s25 = ssub.s32 %s20, 1
      %s26 = ssub.s32 %s20, 2
      %s33 = sadd.s32 1, %s28
      %p34 = scmp.ge.s32.totalorder %s33, 3
      %s35 = scalar_select %p34, 0, %s33
      %s36 = sadd.s32 1, %s27
      %s37 = scalar_select %p34, %s36, %s27
      %p38 = scmp.ge.s32.totalorder %s37, 2
      %s39 = scalar_select %p38, 0, %s37
      %s40 = ssub.s32 %s28, %s35
      %p41 = scmp.eq.s32.totalorder %s40, 0
      %s43 = sadd.s32 %s42, 1
      %s44 = scalar_select %p41, %s42, %s43
      %p47 = pneg %p41
      %p48 = scmp.eq.s32.totalorder %s20, 5
      %p49 = por %p47, %p48
      %p50 = scmp.ne.s32.totalorder %s42, %s45
      %p51 = scmp.eq.s32.totalorder %s20, 0
      %p52 = por %p50, %p51
      %p53 = scmp.ne.s32.totalorder %s42, %s45
      %p54 = scmp.eq.s32.totalorder %s25, 5
      %p55 = por %p53, %p54
      %p56 = scmp.ne.s32.totalorder %s45, %s46
      %p57 = scmp.eq.s32.totalorder %s25, 0
      %p58 = por %p56, %p57
      %p59 = scmp.ne.s32.totalorder %s45, %s46
      %p60 = scmp.eq.s32.totalorder %s26, 5
      %p61 = por %p59, %p60
      %p63 = scmp.ne.s32.totalorder %s46, %s62
      %p64 = scmp.eq.s32.totalorder %s26, 0
      %p65 = por %p63, %p64
      %s66 = ssub.s32 %s28, %s35
      %s67 = ssub.s32 %s27, %s39
      %s68 = sor.u32 %s66, %s67
      %p69 = scmp.eq.s32.totalorder %s68, 0
      %s71 = sadd.s32 %s70, 1
      %s72 = scalar_select %p69, %s70, %s71
      %p75 = pneg %p69
      %p76 = scmp.eq.s32.totalorder %s20, 5
      %p77 = por %p75, %p76
      %p78 = scmp.ne.s32.totalorder %s70, %s73
      %p79 = scmp.eq.s32.totalorder %s20, 0
      %p80 = por %p78, %p79
      %p81 = scmp.ne.s32.totalorder %s70, %s73
      %p82 = scmp.eq.s32.totalorder %s25, 5
      %p83 = por %p81, %p82
      %p84 = scmp.ne.s32.totalorder %s73, %s74
      %p85 = scmp.eq.s32.totalorder %s25, 0
      %p86 = por %p84, %p85
      %p87 = scmp.ne.s32.totalorder %s73, %s74
      %p88 = scmp.eq.s32.totalorder %s26, 5
      %p89 = por %p87, %p88
      %p91 = scmp.ne.s32.totalorder %s74, %s90
      %p92 = scmp.eq.s32.totalorder %s26, 0
      %p93 = por %p91, %p92
      %s94 = ssub.s32 %s27, %s39
      %p95 = scmp.eq.s32.totalorder %s94, 0
      %s97 = sadd.s32 %s96, 1
      %s98 = scalar_select %p95, %s96, %s97
      %p101 = pneg %p95
      %p102 = scmp.eq.s32.totalorder %s20, 5
      %p103 = por %p101, %p102
      %p104 = scmp.ne.s32.totalorder %s96, %s99
      %p105 = scmp.eq.s32.totalorder %s20, 0
      %p106 = por %p104, %p105
      %p107 = scmp.ne.s32.totalorder %s96, %s99
      %p108 = scmp.eq.s32.totalorder %s25, 5
      %p109 = por %p107, %p108
      %p110 = scmp.ne.s32.totalorder %s99, %s100
      %p111 = scmp.eq.s32.totalorder %s25, 0
      %p112 = por %p110, %p111
      %p113 = scmp.ne.s32.totalorder %s99, %s100
      %p114 = scmp.eq.s32.totalorder %s26, 5
      %p115 = por %p113, %p114
      %p117 = scmp.ne.s32.totalorder %s100, %s116
      %p118 = scmp.eq.s32.totalorder %s26, 0
      %p119 = por %p117, %p118
      %s120 = ssub.s32 %s27, %s39
      %p121 = scmp.eq.s32.totalorder %s120, 0
      %s123 = sadd.s32 %s122, 1
      %s124 = scalar_select %p121, %s122, %s123
      %p127 = pneg %p121
      %p128 = scmp.eq.s32.totalorder %s20, 5
      %p129 = por %p127, %p128
      %p130 = scmp.ne.s32.totalorder %s122, %s125
      %p131 = scmp.eq.s32.totalorder %s20, 0
      %p132 = por %p130, %p131
      %p133 = scmp.ne.s32.totalorder %s122, %s125
      %p134 = scmp.eq.s32.totalorder %s25, 5
      %p135 = por %p133, %p134
      %p136 = scmp.ne.s32.totalorder %s125, %s126
      %p137 = scmp.eq.s32.totalorder %s25, 0
      %p138 = por %p136, %p137
      %p139 = scmp.ne.s32.totalorder %s125, %s126
      %p140 = scmp.eq.s32.totalorder %s26, 5
      %p141 = por %p139, %p140
      %p143 = scmp.ne.s32.totalorder %s126, %s142
      %p144 = scmp.eq.s32.totalorder %s26, 0
      %p145 = por %p143, %p144
      %s146 = ssub.s32 %s27, %s39
      %p147 = scmp.eq.s32.totalorder %s146, 0
      %s149 = sadd.s32 %s148, 1
      %s150 = scalar_select %p147, %s148, %s149
      %p153 = pneg %p147
      %p154 = scmp.eq.s32.totalorder %s20, 5
      %p155 = por %p153, %p154
      %p156 = scmp.ne.s32.totalorder %s148, %s151
      %p157 = scmp.eq.s32.totalorder %s20, 0
      %p158 = por %p156, %p157
      %p159 = scmp.ne.s32.totalorder %s148, %s151
      %p160 = scmp.eq.s32.totalorder %s25, 5
      %p161 = por %p159, %p160
      %p162 = scmp.ne.s32.totalorder %s151, %s152
      %p163 = scmp.eq.s32.totalorder %s25, 0
      %p164 = por %p162, %p163
      %p165 = scmp.ne.s32.totalorder %s151, %s152
      %p166 = scmp.eq.s32.totalorder %s26, 5
      %p167 = por %p165, %p166
      %p169 = scmp.ne.s32.totalorder %s152, %s168
      %p170 = scmp.eq.s32.totalorder %s26, 0
      %p171 = por %p169, %p170
      %s172 = ssub.s32 %s27, %s39
      %p173 = scmp.eq.s32.totalorder %s172, 0
      %s175 = sadd.s32 %s174, 1
      %s176 = scalar_select %p173, %s174, %s175
      %p179 = pneg %p173
      %p180 = scmp.eq.s32.totalorder %s20, 5
      %p181 = por %p179, %p180
      %p182 = scmp.ne.s32.totalorder %s174, %s177
      %p183 = scmp.eq.s32.totalorder %s20, 0
      %p184 = por %p182, %p183
      %p185 = scmp.ne.s32.totalorder %s174, %s177
      %p186 = scmp.eq.s32.totalorder %s25, 5
      %p187 = por %p185, %p186
      %p188 = scmp.ne.s32.totalorder %s177, %s178
      %p189 = scmp.eq.s32.totalorder %s25, 0
      %p190 = por %p188, %p189
      %p191 = scmp.ne.s32.totalorder %s177, %s178
      %p192 = scmp.eq.s32.totalorder %s26, 5
      %p193 = por %p191, %p192
      %p195 = scmp.ne.s32.totalorder %s178, %s194
      %p196 = scmp.eq.s32.totalorder %s26, 0
      %p197 = por %p195, %p196
      %p198 = scmp.le.s32.totalorder 1, %s20
      %p199 = scmp.lt.s32.totalorder %s20, 7
      %p200 = pnand %p198, %p199
      %p201 = pneg %p200
      // Predicated region
      $region9: #{tpu_custom_call.1} parent=5 // pred_check
        _
      $region10: #{tpu_custom_call.1} parent=5 // pred_check_branch
        %203 = sbr.rel (%p200) target = $region12
      $region11: #{tpu_custom_call.1} parent=5 // pred_region
        %s204 = ssub.s32 %s20, 1
      $region12: #{tpu_custom_call.1} parent=5 // pred_fallthru
        _
      %p205 = scmp.lt.s32.totalorder %s20, 6
      // Predicated region
      $region13: #{tpu_custom_call.1} parent=5 // pred_check
        %p206 = pneg %p205
      $region14: #{tpu_custom_call.1} parent=5 // pred_check_branch
        %208 = sbr.rel (%p206) target = $region16
      $region15: #{tpu_custom_call.1} parent=5 // pred_region
        // Predicated region
        $region17: #{tpu_custom_call.1} parent=15 // pred_check
          %p209 = pneg %p52
        $region18: #{tpu_custom_call.1} parent=15 // pred_check_branch
          %211 = sbr.rel (%p209) target = $region20
        $region19: #{tpu_custom_call.1} parent=15 // pred_region
          %s212 = sand.u32 %s42, 1
          %s213 = scalar_lea.sflag [#allocation4], %s212
          %s214 = sand.u32 %s42, 1
          %s215 = smul.addr %s214, 4
          %s216 = scalar_lea.vmem [#allocation3], %s215
          %s218 = ssub.s32 64, 64
          %219 = vsyncadd %s213, %s218
          %s220 = smul.addr %s28, 64
          %s221 = scalar_lea.hbm %s0, %s220
          %s223 = sshll.u32 %s216, 4
          %s224 = int_to_ptr.vmem [resolvable:$true] %s223
          %226 = dma.hbm_to_vmem [thread:$0]  %s221, 64, %s224, %s213
        $region20: #{tpu_custom_call.1} parent=15 // pred_fallthru
          _
        // Predicated region
        $region21: #{tpu_custom_call.1} parent=15 // pred_check
          %p227 = pneg %p80
        $region22: #{tpu_custom_call.1} parent=15 // pred_check_branch
          %229 = sbr.rel (%p227) target = $region24
        $region23: #{tpu_custom_call.1} parent=15 // pred_region
          %s230 = sand.u32 %s20, 1
          %s231 = scalar_lea.sflag [#allocation7], %s230
          %s232 = sand.u32 %s70, 1
          %s233 = smul.addr %s232, 64
          %s234 = scalar_lea.vmem [#allocation6], %s233
          %s235 = smul.u32 16, %s28
          %s237 = ssub.s32 1024, 1024
          %238 = vsyncadd %s231, %s237
          %s239 = smul.addr %s235, 2
          %s240 = sadd.s32 %s27, %s239
          %s241 = smul.addr %s240, 64
          %s242 = scalar_lea.hbm %s1, %s241
          %s243 = sshll.u32 %s234, 4
          %s244 = int_to_ptr.vmem [resolvable:$true] %s243
          %249 = dma.hbm_to_vmem [thread:$0]  %s242, 1024, %s244, %s231, 128, 64, 4
        $region24: #{tpu_custom_call.1} parent=15 // pred_fallthru
          _
        // Predicated region
        $region25: #{tpu_custom_call.1} parent=15 // pred_check
          %p250 = pneg %p106
        $region26: #{tpu_custom_call.1} parent=15 // pred_check_branch
          %252 = sbr.rel (%p250) target = $region28
        $region27: #{tpu_custom_call.1} parent=15 // pred_region
          %p253 = scmp.lt.s32.totalorder %s27, 1
          %s254 = scalar_select %p253, %s27, 1
          %s255 = scalar_lea.vmem %s2, %s254
        $region28: #{tpu_custom_call.1} parent=15 // pred_fallthru
          _
        // Predicated region
        $region29: #{tpu_custom_call.1} parent=15 // pred_check
          %p256 = pneg %p132
        $region30: #{tpu_custom_call.1} parent=15 // pred_check_branch
          %258 = sbr.rel (%p256) target = $region32
        $region31: #{tpu_custom_call.1} parent=15 // pred_region
          %p259 = scmp.lt.s32.totalorder %s27, 1
          %s260 = scalar_select %p259, %s27, 1
          %s261 = scalar_lea.vmem %s3, %s260
        $region32: #{tpu_custom_call.1} parent=15 // pred_fallthru
          _
        // Predicated region
        $region33: #{tpu_custom_call.1} parent=15 // pred_check
          %p262 = pneg %p158
        $region34: #{tpu_custom_call.1} parent=15 // pred_check_branch
          %264 = sbr.rel (%p262) target = $region36
        $region35: #{tpu_custom_call.1} parent=15 // pred_region
          %s265 = sand.u32 %s20, 1
          %s266 = scalar_lea.sflag [#allocation7], %s265
          %s267 = sand.u32 %s148, 1
          %s268 = smul.addr %s267, 64
          %s269 = scalar_lea.vmem [#allocation8], %s268
          %s270 = smul.u32 16, %s27
          %s272 = ssub.s32 1024, 1024
          %273 = vsyncadd %s266, %s272
          %s274 = smul.addr %s270, 64
          %s275 = scalar_lea.hbm %s4, %s274
          %s276 = sshll.u32 %s269, 4
          %s277 = int_to_ptr.vmem [resolvable:$true] %s276
          %282 = dma.hbm_to_vmem [thread:$0]  %s275, 1024, %s277, %s266, 64, 64, 4
        $region36: #{tpu_custom_call.1} parent=15 // pred_fallthru
          _
      $region16: #{tpu_custom_call.1} parent=5 // pred_fallthru
        _
      %p283 = scmp.le.s32.totalorder 1, %s20
      %p284 = scmp.lt.s32.totalorder %s20, 7
      %p285 = pnand %p283, %p284
      %p286 = pneg %p285
      // Predicated region
      $region37: #{tpu_custom_call.1} parent=5 // pred_check
        _
      $region38: #{tpu_custom_call.1} parent=5 // pred_check_branch
        %288 = sbr.rel (%p285) target = $region40
      $region39: #{tpu_custom_call.1} parent=5 // pred_region
        %s289 = ssub.s32 %s20, 1
        %s290 = sand.u32 %s45, 1
        %s291 = scalar_lea.sflag [#allocation4], %s290
        %s292 = sand.u32 %s45, 1
        %s293 = smul.addr %s292, 4
        %s294 = scalar_lea.vmem [#allocation3], %s293
        // Predicated region
        $region41: #{tpu_custom_call.1} parent=39 // pred_check
          %p295 = pneg %p58
        $region42: #{tpu_custom_call.1} parent=39 // pred_check_branch
          %297 = sbr.rel (%p295) target = $region44
        $region43: #{tpu_custom_call.1} parent=39 // pred_region
          %298 = dma.done %s291, 64
        $region44: #{tpu_custom_call.1} parent=39 // pred_fallthru
          _
        %s299 = sand.u32 %s25, 1
        %s300 = scalar_lea.sflag [#allocation7], %s299
        %s301 = sand.u32 %s73, 1
        %s302 = smul.addr %s301, 64
        %s303 = scalar_lea.vmem [#allocation6], %s302
        // Predicated region
        $region45: #{tpu_custom_call.1} parent=39 // pred_check
          %p304 = pneg %p86
        $region46: #{tpu_custom_call.1} parent=39 // pred_check_branch
          %306 = sbr.rel (%p304) target = $region48
        $region47: #{tpu_custom_call.1} parent=39 // pred_region
          %307 = dma.done %s300, 1024
        $region48: #{tpu_custom_call.1} parent=39 // pred_fallthru
          _
        %s308 = sand.u32 %s25, 1
        %s309 = scalar_lea.sflag [#allocation7], %s308
        %s310 = sand.u32 %s151, 1
        %s311 = smul.addr %s310, 64
        %s312 = scalar_lea.vmem [#allocation8], %s311
        // Predicated region
        $region49: #{tpu_custom_call.1} parent=39 // pred_check
          %p313 = pneg %p164
        $region50: #{tpu_custom_call.1} parent=39 // pred_check_branch
          %315 = sbr.rel (%p313) target = $region52
        $region51: #{tpu_custom_call.1} parent=39 // pred_region
          %316 = dma.done %s309, 1024
        $region52: #{tpu_custom_call.1} parent=39 // pred_fallthru
          _
        %s317 = sand.u32 %s45, 1
        %s318 = scalar_lea.sflag [#allocation4], %s317
        %s319 = sand.u32 %s45, 1
        %s320 = smul.addr %s319, 4
        %s321 = scalar_lea.vmem [#allocation3], %s320
        %p322 = pneg %p58
        %p323 = pneg %p55
        %s324 = sand.u32 %s25, 1
        %s325 = scalar_lea.sflag [#allocation7], %s324
        %s326 = sand.u32 %s73, 1
        %s327 = smul.addr %s326, 64
        %s328 = scalar_lea.vmem [#allocation6], %s327
        %p329 = pneg %p86
        %p330 = pneg %p83
        %p331 = scmp.lt.s32.totalorder %s29, 1
        %s332 = scalar_select %p331, %s29, 1
        %s333 = scalar_lea.vmem %s2, %s332
        %p334 = pneg %p112
        %p335 = pneg %p109
        %p336 = scmp.lt.s32.totalorder %s29, 1
        %s337 = scalar_select %p336, %s29, 1
        %s338 = scalar_lea.vmem %s3, %s337
        %p339 = pneg %p138
        %p340 = pneg %p135
        %s341 = sand.u32 %s25, 1
        %s342 = scalar_lea.sflag [#allocation7], %s341
        %s343 = sand.u32 %s151, 1
        %s344 = smul.addr %s343, 64
        %s345 = scalar_lea.vmem [#allocation8], %s344
        %p346 = pneg %p164
        %p347 = pneg %p161
        %p348 = pneg %p190
        %p349 = pneg %p187
        %s350 = sand.u32 %s177, 1
        %s351 = scalar_lea.sflag [#allocation5], %s350
        %s352 = sand.u32 %s177, 1
        %s353 = smul.addr %s352, 8
        %s354 = scalar_lea.vmem [#allocation9], %s353
        %s355 = smul.u32 16, %s30
        %p356 = scmp.lt.s32.totalorder %s29, 1
        %s357 = scalar_select %p356, %s29, 1
        %s358 = scalar_lea.vmem %s2, %s357
        %p359 = scmp.lt.s32.totalorder %s29, 1
        %s360 = scalar_select %p359, %s29, 1
        %s361 = scalar_lea.vmem %s3, %s360
        %s362 = smul.u32 16, %s29
        %p364 = scmp.eq.s32.totalorder %s30, 0
        // Predicated region
        $region53: #{tpu_custom_call.1} parent=39 // pred_check
          %p365 = pneg %p364
        $region54: #{tpu_custom_call.1} parent=39 // pred_check_branch
          %367 = sbr.rel (%p365) target = $region56
        $region55: #{tpu_custom_call.1} parent=39 // pred_region
          %368 = vst [vmem:[#allocation2] sm:$0xff] 0.0
        $region56: #{tpu_custom_call.1} parent=39 // pred_fallthru
          _
        %v369 = vld [vmem:[#allocation2] sm:$0xff]
        %v370 = vld [vmem:[%s294] sm:$0xf]
        %v371 = vld [vmem:[%s303] sm:$0xf]
        %v372 = vld [vmem:[%s303 + $0x4] sm:$0xf]
        %v373 = vld [vmem:[%s303 + $0x8] sm:$0xf]
        %v374 = vld [vmem:[%s303 + $0xc] sm:$0xf]
        %v375 = vld [vmem:[%s303 + $0x10] sm:$0xf]
        %v376 = vld [vmem:[%s303 + $0x14] sm:$0xf]
        %v377 = vld [vmem:[%s303 + $0x18] sm:$0xf]
        %v378 = vld [vmem:[%s303 + $0x1c] sm:$0xf]
        %v379 = vld [vmem:[%s303 + $0x20] sm:$0xf]
        %v380 = vld [vmem:[%s303 + $0x24] sm:$0xf]
        %v381 = vld [vmem:[%s303 + $0x28] sm:$0xf]
        %v382 = vld [vmem:[%s303 + $0x2c] sm:$0xf]
        %v383 = vld [vmem:[%s303 + $0x30] sm:$0xf]
        %v384 = vld [vmem:[%s303 + $0x34] sm:$0xf]
        %v385 = vld [vmem:[%s303 + $0x38] sm:$0xf]
        %v386 = vld [vmem:[%s303 + $0x3c] sm:$0xf]
        %v403 = vunpack.c.l.b16 %v371
        %v404 = vunpack.c.l.b16 %v372
        %v405 = vunpack.c.l.b16 %v373
        %v406 = vunpack.c.l.b16 %v374
        %v407 = vunpack.c.l.b16 %v375
        %v408 = vunpack.c.l.b16 %v376
        %v409 = vunpack.c.l.b16 %v377
        %v410 = vunpack.c.l.b16 %v378
        %v411 = vunpack.c.l.b16 %v379
        %v412 = vunpack.c.l.b16 %v380
        %v413 = vunpack.c.l.b16 %v381
        %v414 = vunpack.c.l.b16 %v382
        %v415 = vunpack.c.l.b16 %v383
        %v416 = vunpack.c.l.b16 %v384
        %v417 = vunpack.c.l.b16 %v385
        %v418 = vunpack.c.l.b16 %v386
        %v419 = vpack.c.b16 %v404, %v403
        %v420 = vpack.c.b16 %v406, %v405
        %v421 = vpack.c.b16 %v408, %v407
        %v422 = vpack.c.b16 %v410, %v409
        %v423 = vpack.c.b16 %v412, %v411
        %v424 = vpack.c.b16 %v414, %v413
        %v425 = vpack.c.b16 %v416, %v415
        %v426 = vpack.c.b16 %v418, %v417
        %435 = vmatprep.subr.bf16.mxu0 0
        %436 = vmatpush1.bf16.msra.mxu0 %v419
        %437 = vmatprep.subr.bf16.mxu0 0
        %438 = vmatpush1.bf16.msra.mxu0 %v420
        %439 = vmatprep.subr.bf16.mxu0 0
        %440 = vmatpush1.bf16.msra.mxu0 %v421
        %441 = vmatprep.subr.bf16.mxu0 0
        %442 = vmatpush1.bf16.msra.mxu0 %v422
        %443 = vmatprep.subr.bf16.mxu0 0
        %444 = vmatpush1.bf16.msra.mxu0 %v423
        %445 = vmatprep.subr.bf16.mxu0 0
        %446 = vmatpush1.bf16.msra.mxu0 %v424
        %447 = vmatprep.subr.bf16.mxu0 0
        %448 = vmatpush1.bf16.msra.mxu0 %v425
        %449 = vmatprep.subr.bf16.mxu0 0
        %450 = vmatpush1.bf16.msra.mxu0 %v426
        %451 = vmatprep.subr.bf16.mxu0 0
        %452 = vmatpush1.bf16.msra.mxu0 0
        %453 = vmatprep.subr.bf16.mxu0 0
        %454 = vmatpush1.bf16.msra.mxu0 0
        %455 = vmatprep.subr.bf16.mxu0 0
        %456 = vmatpush1.bf16.msra.mxu0 0
        %457 = vmatprep.subr.bf16.mxu0 0
        %458 = vmatpush1.bf16.msra.mxu0 0
        %459 = vmatprep.subr.bf16.mxu0 0
        %460 = vmatpush1.bf16.msra.mxu0 0
        %461 = vmatprep.subr.bf16.mxu0 0
        %462 = vmatpush1.bf16.msra.mxu0 0
        %463 = vmatprep.subr.bf16.mxu0 0
        %464 = vmatpush1.bf16.msra.mxu0 0
        %465 = vmatprep.subr.bf16.mxu0 0
        %466 = vmatpush1.bf16.msra.mxu0 0
        %467 = vmatprep.mubr.bf16.mxu0 0
        %468 = vmatmul.mubr.bf16.gmra.mrb[0].mxu0 %v370
        %v469 = vpop.f32.mrb[0].mxu0
        %v470 = vadd.f32 0.0, %v469
        %v471 = vpop.f32.mrb[0].mxu0
        %v472 = vpop.f32.mrb[0].mxu0
        %v473 = vpop.f32.mrb[0].mxu0
        %474 = vdwg.mxu0
        %v475 = vadd.f32 %v369, %v470
        %476 = vst [vmem:[#allocation2] sm:$0xff] %v475
        %p477 = scmp.eq.s32.totalorder %s30, 2
        // Predicated region
        $region57: #{tpu_custom_call.1} parent=39 // pred_check
          %p478 = pneg %p477
        $region58: #{tpu_custom_call.1} parent=39 // pred_check_branch
          %480 = sbr.rel (%p478) target = $region60
        $region59: #{tpu_custom_call.1} parent=39 // pred_region
          %v481 = vld [vmem:[#allocation2] sm:$0xff]
          %v482 = vrot.slane %v481, 4
          %v483 = vadd.f32 %v481, %v482
          %v484 = vrot.slane %v483, 2
          %v485 = vadd.f32 %v483, %v484
          %v486 = vrot.slane %v485, 1
          %v487 = vadd.f32 %v485, %v486
          %v488 = vmul.f32 %v487, 0.125
          %v489 = vmul.f32 %v481, %v481
          %v490 = vrot.slane %v489, 4
          %v491 = vadd.f32 %v489, %v490
          %v492 = vrot.slane %v491, 2
          %v493 = vadd.f32 %v491, %v492
          %v494 = vrot.slane %v493, 1
          %v495 = vadd.f32 %v493, %v494
          %v496 = vmul.f32 %v495, 0.125
          %v497 = vmul.f32 %v488, %v488
          %v498 = vsub.f32 %v496, %v497
          %v499 = vmax.f32 %v498, 0.0
          %v500 = vadd.f32 %v499, 1e-05
          %v501 = vrsqrt.pop %v500
          %v502 = vld [vmem:[%s358] sm:$0x1]
          %v503 = vmul.f32 %v502, %v501
          %v504 = vld [vmem:[%s361] sm:$0x1]
          %v505 = vmul.f32 %v488, %v503
          %v506 = vsub.f32 %v504, %v505
          %v508 = vlaneseq
          %v509 = vshrl.u32 %v508, 7
          %v510 = vsub.s32 0, %v509
          %v511 = vrot.slane %v503, %v510
          %v513 = vmul.f32 %v481, %v511
          %v515 = vlaneseq
          %v516 = vshrl.u32 %v515, 7
          %v517 = vsub.s32 0, %v516
          %v518 = vrot.slane %v506, %v517
          %v520 = vadd.f32 %v513, %v518
          %vm521 = vcmp.ge.f32.partialorder %v520, 0.0
          %v522 = vmul.f32 %v520, 0.01
          %v523 = vsel %vm521, %v520, %v522
          %v524 = vpack.c.bf16 %v523, %v523
          %v525 = vld [vmem:[%s312] sm:$0xf]
          %v526 = vld [vmem:[%s312 + $0x4] sm:$0xf]
          %v527 = vld [vmem:[%s312 + $0x8] sm:$0xf]
          %v528 = vld [vmem:[%s312 + $0xc] sm:$0xf]
          %v529 = vld [vmem:[%s312 + $0x10] sm:$0xf]
          %v530 = vld [vmem:[%s312 + $0x14] sm:$0xf]
          %v531 = vld [vmem:[%s312 + $0x18] sm:$0xf]
          %v532 = vld [vmem:[%s312 + $0x1c] sm:$0xf]
          %v533 = vld [vmem:[%s312 + $0x20] sm:$0xf]
          %v534 = vld [vmem:[%s312 + $0x24] sm:$0xf]
          %v535 = vld [vmem:[%s312 + $0x28] sm:$0xf]
          %v536 = vld [vmem:[%s312 + $0x2c] sm:$0xf]
          %v537 = vld [vmem:[%s312 + $0x30] sm:$0xf]
          %v538 = vld [vmem:[%s312 + $0x34] sm:$0xf]
          %v539 = vld [vmem:[%s312 + $0x38] sm:$0xf]
          %v540 = vld [vmem:[%s312 + $0x3c] sm:$0xf]
          %v557 = vunpack.c.l.b16 %v525
          %v558 = vunpack.c.l.b16 %v526
          %v559 = vunpack.c.l.b16 %v527
          %v560 = vunpack.c.l.b16 %v528
          %v561 = vunpack.c.l.b16 %v529
          %v562 = vunpack.c.l.b16 %v530
          %v563 = vunpack.c.l.b16 %v531
          %v564 = vunpack.c.l.b16 %v532
          %v565 = vunpack.c.l.b16 %v533
          %v566 = vunpack.c.l.b16 %v534
          %v567 = vunpack.c.l.b16 %v535
          %v568 = vunpack.c.l.b16 %v536
          %v569 = vunpack.c.l.b16 %v537
          %v570 = vunpack.c.l.b16 %v538
          %v571 = vunpack.c.l.b16 %v539
          %v572 = vunpack.c.l.b16 %v540
          %v573 = vpack.c.b16 %v558, %v557
          %v574 = vpack.c.b16 %v560, %v559
          %v575 = vpack.c.b16 %v562, %v561
          %v576 = vpack.c.b16 %v564, %v563
          %v577 = vpack.c.b16 %v566, %v565
          %v578 = vpack.c.b16 %v568, %v567
          %v579 = vpack.c.b16 %v570, %v569
          %v580 = vpack.c.b16 %v572, %v571
          %589 = vmatprep.subr.bf16.mxu0 0
          %590 = vmatpush1.bf16.msra.mxu0 %v573
          %591 = vmatprep.subr.bf16.mxu0 0
          %592 = vmatpush1.bf16.msra.mxu0 %v574
          %593 = vmatprep.subr.bf16.mxu0 0
          %594 = vmatpush1.bf16.msra.mxu0 %v575
          %595 = vmatprep.subr.bf16.mxu0 0
          %596 = vmatpush1.bf16.msra.mxu0 %v576
          %597 = vmatprep.subr.bf16.mxu0 0
          %598 = vmatpush1.bf16.msra.mxu0 %v577
          %599 = vmatprep.subr.bf16.mxu0 0
          %600 = vmatpush1.bf16.msra.mxu0 %v578
          %601 = vmatprep.subr.bf16.mxu0 0
          %602 = vmatpush1.bf16.msra.mxu0 %v579
          %603 = vmatprep.subr.bf16.mxu0 0
          %604 = vmatpush1.bf16.msra.mxu0 %v580
          %605 = vmatprep.subr.bf16.mxu0 0
          %606 = vmatpush1.bf16.msra.mxu0 0
          %607 = vmatprep.subr.bf16.mxu0 0
          %608 = vmatpush1.bf16.msra.mxu0 0
          %609 = vmatprep.subr.bf16.mxu0 0
          %610 = vmatpush1.bf16.msra.mxu0 0
          %611 = vmatprep.subr.bf16.mxu0 0
          %612 = vmatpush1.bf16.msra.mxu0 0
          %613 = vmatprep.subr.bf16.mxu0 0
          %614 = vmatpush1.bf16.msra.mxu0 0
          %615 = vmatprep.subr.bf16.mxu0 0
          %616 = vmatpush1.bf16.msra.mxu0 0
          %617 = vmatprep.subr.bf16.mxu0 0
          %618 = vmatpush1.bf16.msra.mxu0 0
          %619 = vmatprep.subr.bf16.mxu0 0
          %620 = vmatpush1.bf16.msra.mxu0 0
          %621 = vmatprep.mubr.bf16.mxu0 0
          %622 = vmatmul.mubr.bf16.gmra.mrb[0].mxu0 %v524
          %v623 = vpop.f32.mrb[0].mxu0
          %v624 = vadd.f32 0.0, %v623
          %v625 = vpop.f32.mrb[0].mxu0
          %v626 = vpop.f32.mrb[0].mxu0
          %v627 = vpop.f32.mrb[0].mxu0
          %628 = vdwg.mxu0
          %629 = vst [vmem:[%s354] sm:$0xff] %v624
        $region60: #{tpu_custom_call.1} parent=39 // pred_fallthru
          _
        %s630 = sand.u32 %s177, 1
        %s631 = scalar_lea.sflag [#allocation5], %s630
        %s632 = sand.u32 %s177, 1
        %s633 = smul.addr %s632, 8
        %s634 = scalar_lea.vmem [#allocation9], %s633
        // Predicated region
        $region61: #{tpu_custom_call.1} parent=39 // pred_check
          %p635 = pneg %p187
        $region62: #{tpu_custom_call.1} parent=39 // pred_check_branch
          %637 = sbr.rel (%p635) target = $region64
        $region63: #{tpu_custom_call.1} parent=39 // pred_region
          %s639 = ssub.s32 128, 128
          %640 = vsyncadd %s631, %s639
          %s641 = smul.addr %s29, 128
          %s642 = scalar_lea.hbm %s5, %s641
          %s644 = sshll.u32 %s634, 4
          %s645 = int_to_ptr.vmem [resolvable:$true] %s644
          %647 = dma.vmem_to_hbm [thread:$0]  %s645, 128, %s642, %s631
        $region64: #{tpu_custom_call.1} parent=39 // pred_fallthru
          _
      $region40: #{tpu_custom_call.1} parent=5 // pred_fallthru
        _
      %p648 = scmp.le.s32.totalorder 2, %s20
      // Predicated region
      $region65: #{tpu_custom_call.1} parent=5 // pred_check
        %p649 = pneg %p648
      $region66: #{tpu_custom_call.1} parent=5 // pred_check_branch
        %651 = sbr.rel (%p649) target = $region68
      $region67: #{tpu_custom_call.1} parent=5 // pred_region
        %s652 = ssub.s32 %s20, 2
        // Predicated region
        $region69: #{tpu_custom_call.1} parent=67 // pred_check
          %p653 = pneg %p193
        $region70: #{tpu_custom_call.1} parent=67 // pred_check_branch
          %655 = sbr.rel (%p653) target = $region72
        $region71: #{tpu_custom_call.1} parent=67 // pred_region
          %s656 = sand.u32 %s178, 1
          %s657 = scalar_lea.sflag [#allocation5], %s656
          %s658 = sand.u32 %s178, 1
          %s659 = smul.addr %s658, 8
          %s660 = scalar_lea.vmem [#allocation9], %s659
          %661 = dma.done %s657, 128
        $region72: #{tpu_custom_call.1} parent=67 // pred_fallthru
          _
      $region68: #{tpu_custom_call.1} parent=5 // pred_fallthru
        _
    $region6: #{tpu_custom_call.1} parent=1 // loop_footer
      %s24 = sadd.s32 1, %s20
    $region7: #{tpu_custom_call.1} parent=1 // loop_footer_branch
      %19 = sbr.rel target = $region3
    $region8: #{tpu_custom_call.1} parent=1 // loop_exit
      _
    %662 = vsyncpa [#allocation4], 1
    %s663 = scalar_lea.sflag [#allocation4], 1
    %664 = vsyncpa %s663, 1
    %665 = vsyncpa [#allocation7], 1
    %s666 = scalar_lea.sflag [#allocation7], 1
    %667 = vsyncpa %s666, 1
    %668 = vsyncpa [#allocation5], 1
    %s669 = scalar_lea.sflag [#allocation5], 1
    %670 = vsyncpa %s669, 1

</llo_original>
